<compile_context>
chip_gen: v7x
topology: tpu7x:2x2x1
jax: 0.10.0
libtpu: 0.0.40
codegen_flags: <defaults>
</compile_context>

<pallas_src>
import functools

import jax
import jax.numpy as jnp
from jax.experimental import pallas as pl
from jax.experimental.pallas import tpu as pltpu

_LANE = 128
_TARGET_TILE_BYTES = 2 * 1024 * 1024   # ~2 MiB x-tile (review: 1-4 MiB sweet spot)
_VMEM_BUDGET_BYTES = 10 * 1024 * 1024  # conservative double-buffered footprint cap
_NB_MAX = 8                            # bound on the static in-kernel batch unroll


def _cdiv(a, b):
    return -(-a // b)


def _round_down(x, m):
    return max(m, (x // m) * m)


def _round_up(x, m):
    return ((x + m - 1) // m) * m


def _choose_tiles(N, C, OUT, HW, in_itemsize, out_itemsize):
    """Pick (NB, THW): per-step x DMA ~_TARGET_TILE_BYTES, double-buffered
    footprint within _VMEM_BUDGET_BYTES, and >= 2 grid steps when possible."""
    # Spatial tile: full HW when it already meets the byte target, otherwise a
    # multiple of 128 lanes (ragged tail handled by Pallas masked stores).
    if HW <= _LANE:
        thw = HW
    else:
        pix = max(_LANE, _TARGET_TILE_BYTES // max(1, C * in_itemsize))
        thw = HW if pix >= HW else _round_down(pix, _LANE)

    # Fold batch elements per step when one spatial tile is still small
    # (tiny-HW / large-N regime: multiplies DMA size, divides grid steps).
    per_batch = C * thw * in_itemsize
    nb = int(min(N, _NB_MAX, max(1, _TARGET_TILE_BYTES // max(1, per_batch))))

    def footprint(nb_, thw_):
        x_t = nb_ * C * thw_ * in_itemsize
        o_t = nb_ * OUT * thw_ * out_itemsize
        acc = nb_ * OUT * thw_ * 4                      # f32 matmul/bias temp
        const = OUT * C * in_itemsize + OUT * 4         # resident weight + bias
        return 2 * (x_t + o_t) + acc + const            # x / out double-buffered

    while nb > 1 and footprint(nb, thw) > _VMEM_BUDGET_BYTES:
        nb -= 1
    while thw > _LANE and footprint(nb, thw) > _VMEM_BUDGET_BYTES:
        thw = _round_down(thw // 2, _LANE)

    # Keep >= 2 grid steps so both v7x TensorCores get work (when possible).
    steps = _cdiv(N, nb) * _cdiv(HW, thw)
    if steps < 2:
        if N >= 2:
            nb = _cdiv(N, 2)
        elif HW > _LANE:
            thw = _round_up(_cdiv(HW, 2), _LANE)
    return nb, thw


def _side_kernel(x_ref, w_ref, b_ref, o_ref):
    # x_ref: (NB, C, THW)   NB batch elements, channels on sublanes, pixels on lanes
    # w_ref: (OUT, C)       stacked 1x1 conv weights (OUT = M * n_class), resident
    # b_ref: (OUT, 1)       stacked biases, float32
    # o_ref: (NB, OUT, THW)
    w = w_ref[...]
    bias = b_ref[...]
    for i in range(x_ref.shape[0]):  # NB <= 8: cheap static unroll, no transposes
        acc = jnp.dot(w, x_ref[i], preferred_element_type=jnp.float32)
        o_ref[i] = (acc + bias).astype(o_ref.dtype)


@functools.partial(jax.jit, static_argnames=("n_class", "M", "out_dtype"))
def _side_classifier_stacked(x_nchw, w_stacked, b_stacked, *, n_class, M,
                             out_dtype=None):
    """Returns the stacked output (N, M*n_class, H, W).

    x_nchw:    (N, C, H, W)   pass bf16 for the bandwidth-optimal production path
    w_stacked: (M*n_class, C) heads stacked along the output-channel axis
    b_stacked: (M*n_class,)
    """
    N, C, H, W = x_nchw.shape
    OUT = M * n_class
    HW = H * W
    out_dtype = x_nchw.dtype if out_dtype is None else out_dtype

    # Free view only — no transpose, no padding, no extra HBM passes.
    x_flat = x_nchw.reshape(N, C, HW)
    w2d = w_stacked.astype(x_nchw.dtype)                  # tiny; match compute dtype
    b2d = b_stacked.astype(jnp.float32).reshape(OUT, 1)   # bias add stays f32

    in_itemsize = jnp.dtype(x_nchw.dtype).itemsize
    out_itemsize = jnp.dtype(out_dtype).itemsize
    nb, thw = _choose_tiles(N, C, OUT, HW, in_itemsize, out_itemsize)
    grid = (_cdiv(N, nb), _cdiv(HW, thw))
    n_steps = grid[0] * grid[1]

    # Deeper pipelining on x only when tiles stay tiny (very small C) and there
    # are enough steps to overlap; hides DMA issue latency.
    x_tile_bytes = nb * C * thw * in_itemsize
    x_spec_kwargs = (
        {"pipeline_mode": pl.Buffered(3)}
        if (x_tile_bytes < 512 * 1024 and n_steps >= 4)
        else {}
    )

    out_flat = pl.pallas_call(
        _side_kernel,
        out_shape=jax.ShapeDtypeStruct((N, OUT, HW), out_dtype),
        grid_spec=pltpu.PrefetchScalarGridSpec(
            num_scalar_prefetch=0,
            grid=grid,
            in_specs=[
                # x tile: NB batches, full channel axis, thw pixels on lanes.
                pl.BlockSpec((nb, C, thw), lambda n, t: (n, 0, t), **x_spec_kwargs),
                # Stacked weight / bias: tiny, resident across the whole grid.
                pl.BlockSpec((OUT, C), lambda n, t: (0, 0)),
                pl.BlockSpec((OUT, 1), lambda n, t: (0, 0)),
            ],
            out_specs=pl.BlockSpec((nb, OUT, thw), lambda n, t: (n, 0, t)),
        ),
        compiler_params=pltpu.CompilerParams(
            # Both grid axes independent -> sharded across v7x's 2 TensorCores;
            # near-zero effect on single-TC v5e/v6e.  No vmem_limit override.
            dimension_semantics=("parallel", "parallel"),
        ),
        cost_estimate=pl.CostEstimate(
            flops=2 * N * HW * C * OUT,
            transcendentals=0,
            bytes_accessed=(in_itemsize * (N * HW * C + OUT * C)
                            + 4 * OUT
                            + out_itemsize * N * HW * OUT),
        ),
    )(x_flat, w2d, b2d)

    # Free view back to spatial layout (already NCHW, no slicing needed).
    return out_flat.reshape(N, OUT, H, W)


def side_classifier_forward_stacked(x_nchw, w_stacked, b_stacked, *, n_class, M,
                                    out_dtype=None):
    """Preferred API: all M heads as one (N, M, n_class, H, W) tensor — a free
    reshape of the kernel output, no per-head copies."""
    out = _side_classifier_stacked(x_nchw, w_stacked, b_stacked,
                                   n_class=n_class, M=M, out_dtype=out_dtype)
    N, _, H, W = out.shape
    return out.reshape(N, M, n_class, H, W)


def side_classifier_forward(x_nchw, w_stacked, b_stacked, *, n_class, M,
                            out_dtype=None):
    """Matches SideClassifer.forward: list of M tensors, each (N, n_class, H, W).

    NOTE: each list element is an XLA slice (an extra HBM read+write of the
    head's output) — prefer side_classifier_forward_stacked when the consumer
    can take the fused tensor."""
    out = side_classifier_forward_stacked(x_nchw, w_stacked, b_stacked,
                                          n_class=n_class, M=M, out_dtype=out_dtype)
    return [out[:, m] for m in range(M)]


def init_side_classifier_params(key, ic, n_class=1, M=2, dtype=jnp.float32):
    """Deterministic init mimicking nn.Conv2d default (uniform +/- 1/sqrt(ic))
    for kernel_size=1.  Returns stacked weight (M*n_class, ic), stacked bias
    (M*n_class,), plus per-head views used for the reference check."""
    bound = 1.0 / (ic ** 0.5)
    kw, kb = jax.random.split(key)
    w = jax.random.uniform(kw, (M, n_class, ic), dtype, -bound, bound)  # per-head (o, c)
    b = jax.random.uniform(kb, (M, n_class), dtype, -bound, bound)
    return w.reshape(M * n_class, ic), b.reshape(M * n_class), w, b


# TODO(synk): kernel_size > 1 (true spatial convolution) is not implemented; the
# module's default kernel_size=1 (pointwise conv) is what this kernel covers.


if __name__ == "__main__":
    ic, n_class, M = 4, 1, 2
    N, H, W = 2, 16, 16

    key = jax.random.PRNGKey(0)
    kx, kp = jax.random.split(key)
    x = jax.random.normal(kx, (N, ic, H, W), jnp.float32)

    w_stacked, b_stacked, w_heads, b_heads = init_side_classifier_params(
        kp, ic, n_class=n_class, M=M
    )

    # --- f32 path: strict module semantics (list of M heads), tight tolerance ---
    outs = side_classifier_forward(x, w_stacked, b_stacked, n_class=n_class, M=M)
    outs = [jax.block_until_ready(o) for o in outs]
    for m in range(M):
        ref = jnp.einsum("nchw,oc->nohw", x, w_heads[m]) + b_heads[m][None, :, None, None]
        assert outs[m].shape == (N, n_class, H, W)
        assert jnp.allclose(outs[m], ref, atol=1e-5, rtol=1e-5)

    # --- bf16 production path: bf16 inputs (half the HBM traffic), f32 accumulation ---
    x_bf16 = x.astype(jnp.bfloat16)
    w_bf16 = w_stacked.astype(jnp.bfloat16)
    stacked = side_classifier_forward_stacked(
        x_bf16, w_bf16, b_stacked, n_class=n_class, M=M, out_dtype=jnp.float32
    )
    stacked = jax.block_until_ready(stacked)
    ref_all = (jnp.einsum("nchw,moc->nmohw", x, w_heads)
               + b_heads[None, :, :, None, None])
    assert stacked.shape == (N, M, n_class, H, W)
    assert jnp.allclose(stacked, ref_all, atol=5e-2, rtol=5e-2)

    print("KERNEL_OK")
</pallas_src>

<mosaic_0001>
module attributes {stable_mosaic.version = 11 : i64} {
  func.func @_side_kernel(%arg0: i32, %arg1: i32, %arg2: memref<1x4x256xf32, #tpu.memory_space<vmem>>, %arg3: memref<2x4xf32, #tpu.memory_space<vmem>>, %arg4: memref<2x1xf32, #tpu.memory_space<vmem>>, %arg5: memref<1x2x256xf32, #tpu.memory_space<vmem>>) attributes {dimension_semantics = [#tpu.dimension_semantics<parallel>, #tpu.dimension_semantics<parallel>], iteration_bounds = array<i64: 2, 1>, scalar_prefetch = 0 : i64, scratch_operands = 0 : i64, tpu.core_type = #tpu.core_type<tc>, window_params = [{transform_indices = @transform_0, window_bounds = array<i64: 1, 4, 256>}, {pipeline_mode = #tpu.pipeline_mode<synchronous>, transform_indices = @transform_1, window_bounds = array<i64: 2, 4>}, {pipeline_mode = #tpu.pipeline_mode<synchronous>, transform_indices = @transform_2, window_bounds = array<i64: 2, 1>}, {transform_indices = @transform_3, window_bounds = array<i64: 1, 2, 256>}]} {
    %c0 = arith.constant 0 : index
    %c0_0 = arith.constant 0 : index
    %0 = vector.load %arg3[%c0, %c0_0] : memref<2x4xf32, #tpu.memory_space<vmem>>, vector<2x4xf32>
    %c0_1 = arith.constant 0 : index
    %c0_2 = arith.constant 0 : index
    %1 = vector.load %arg4[%c0_1, %c0_2] : memref<2x1xf32, #tpu.memory_space<vmem>>, vector<2x1xf32>
    %c0_3 = arith.constant 0 : index
    %c0_4 = arith.constant 0 : index
    %c0_5 = arith.constant 0 : index
    %2 = vector.load %arg2[%c0_3, %c0_4, %c0_5] : memref<1x4x256xf32, #tpu.memory_space<vmem>>, vector<1x4x256xf32>
    %3 = vector.shape_cast %2 : vector<1x4x256xf32> to vector<4x256xf32>
    %cst = arith.constant dense<0.000000e+00> : vector<2x256xf32>
    %4 = tpu.matmul %0, %3, %cst {dimension_numbers = #tpu.dot_dimension_numbers<[1], [0], [0], [1], [0, 0, 1, 1], [], []>} : vector<2x4xf32>, vector<4x256xf32>, vector<2x256xf32> -> vector<2x256xf32>
    %5 = vector.broadcast %1 : vector<2x1xf32> to vector<2x256xf32>
    %6 = arith.addf %4, %5 : vector<2x256xf32>
    %c0_6 = arith.constant 0 : index
    %c0_7 = arith.constant 0 : index
    %c0_8 = arith.constant 0 : index
    %7 = vector.load %arg5[%c0_6, %c0_7, %c0_8] : memref<1x2x256xf32, #tpu.memory_space<vmem>>, vector<1x2x256xf32>
    %8 = vector.shape_cast %7 : vector<1x2x256xf32> to vector<2x256xf32>
    %9 = vector.shape_cast %6 : vector<2x256xf32> to vector<1x2x256xf32>
    tpu.vector_store %arg5[%c0_6, %c0_7, %c0_8], %9 {strides = array<i32>} : memref<1x2x256xf32, #tpu.memory_space<vmem>>, vector<1x2x256xf32>,
    return
  }
  func.func @transform_0(%arg0: i32, %arg1: i32) -> (i32, i32, i32) {
    %c0_i32 = arith.constant 0 : i32
    %c0_i32_0 = arith.constant 0 : i32
    return %arg0, %c0_i32, %arg1 : i32, i32, i32
  }
  func.func @transform_1(%arg0: i32, %arg1: i32) -> (i32, i32) {
    %c0_i32 = arith.constant 0 : i32
    %c0_i32_0 = arith.constant 0 : i32
    %c0_i32_1 = arith.constant 0 : i32
    return %c0_i32, %c0_i32_0 : i32, i32
  }
  func.func @transform_2(%arg0: i32, %arg1: i32) -> (i32, i32) {
    %c0_i32 = arith.constant 0 : i32
    %c0_i32_0 = arith.constant 0 : i32
    %c0_i32_1 = arith.constant 0 : i32
    return %c0_i32, %c0_i32_0 : i32, i32
  }
  func.func @transform_3(%arg0: i32, %arg1: i32) -> (i32, i32, i32) {
    %c0_i32 = arith.constant 0 : i32
    %c0_i32_0 = arith.constant 0 : i32
    return %arg0, %c0_i32, %arg1 : i32, i32, i32
  }
}

</mosaic_0001>

<llo_original>
// kernel: _side_classifier_stacked.1
$region0: #{_side_classifier_stacked.1}
  #allocation0 [shape = 'u32[]', space=smem, size = 0x4, offset = 0x4, fixed_abs, tag = 'smem constant byte address 0x4 - core index']
  #allocation1 [shape = 'u32[144,128]{1,0:T(1,128)}', space=vmem, size = 0x12000, scoped, tag = 'internal scratch']
  %s0 = inlined_call_operand.vmem [shape: f32[2,4,256], index: 0, kind: input, shape index: {}]
  %s1 = inlined_call_operand.vmem [shape: f32[2,4], index: 1, kind: input, shape index: {}]
  %s2 = inlined_call_operand.vmem [shape: f32[2,1], index: 2, kind: input, shape index: {}]
  %s3 = inlined_call_operand.vmem [shape: f32[2,2,256], index: 3, kind: output, shape index: {}]
  %s4 = sld [smem:[#allocation0]]
  $region45: #{_side_classifier_stacked.1} parent=0
    _
  %s6 = ssub.s32 1, %s4
  %s7 = scalar_select 0, %s6, %s4
  loop: start=0, step=1, limit=4
  $region2: #{_side_classifier_stacked.1} parent=0 // loop_pre_header
    _
  $region3: #{_side_classifier_stacked.1} parent=0 // loop_header
    %s9 = sphi 0, %s13
    %p10 = scmp.ge.s32.totalorder %s9, 4
    %s16 = sphi 0, %s28
    %s17 = sphi 0, %s24
    %s18 = sphi 0, %s16
    %s19 = sphi 0, %s17
    %s20 = sphi 0, %s18
    %s21 = sphi 0, %s19
    %s33 = sphi 0, %s35
    %s36 = sphi 0, %s33
    %s37 = sphi 0, %s36
    %s53 = sphi 0, %s37
    %s57 = sphi 0, %s57
    %s59 = sphi 0, %s57
    %s60 = sphi 0, %s59
    %s74 = sphi 0, %s60
    %s78 = sphi 0, %s78
    %s80 = sphi 0, %s78
    %s81 = sphi 0, %s80
    %s95 = sphi 0, %s81
    %s103 = sphi 0, %s105
    %s106 = sphi 0, %s103
    %s107 = sphi 0, %s106
    %s123 = sphi 0, %s107
  $region4: #{_side_classifier_stacked.1} parent=0 // loop_header_branch
    %12 = sbr.rel (%p10) target = $region8
  $region5: #{_side_classifier_stacked.1} parent=0 // loop_body
    %s14 = ssub.s32 %s9, 1
    %s15 = ssub.s32 %s9, 2
    %s22 = sadd.s32 1, %s17
    %p23 = scmp.ge.s32.totalorder %s22, 1
    %s24 = scalar_select %p23, 0, %s22
    %s25 = sadd.s32 1, %s16
    %s26 = scalar_select %p23, %s25, %s16
    %p27 = scmp.ge.s32.totalorder %s26, 2
    %s28 = scalar_select %p27, 0, %s26
    %s29 = ssub.s32 %s16, %s28
    %s30 = ssub.s32 %s17, %s24
    %s31 = sor.u32 %s29, %s30
    %p32 = scmp.eq.s32.totalorder %s31, 0
    %s34 = sadd.s32 %s33, 1
    %s35 = scalar_select %p32, %s33, %s34
    %p38 = pneg %p32
    %p39 = scmp.eq.s32.totalorder %s9, 1
    %p40 = por %p38, %p39
    %p41 = scmp.ne.s32.totalorder %s33, %s36
    %p42 = scmp.eq.s32.totalorder %s9, 0
    %p43 = por %p41, %p42
    %p44 = scmp.ne.s32.totalorder %s33, %s36
    %p45 = scmp.eq.s32.totalorder %s14, 1
    %p46 = por %p44, %p45
    %p47 = scmp.ne.s32.totalorder %s36, %s37
    %p48 = scmp.eq.s32.totalorder %s14, 0
    %p49 = por %p47, %p48
    %p50 = scmp.ne.s32.totalorder %s36, %s37
    %p51 = scmp.eq.s32.totalorder %s15, 1
    %p52 = por %p50, %p51
    %p54 = scmp.ne.s32.totalorder %s37, %s53
    %p55 = scmp.eq.s32.totalorder %s15, 0
    %p56 = por %p54, %p55
    %s58 = sadd.s32 %s57, 1
    %p61 = scmp.eq.s32.totalorder %s9, 1
    %p62 = scmp.ne.s32.totalorder %s57, %s59
    %p63 = scmp.eq.s32.totalorder %s9, 0
    %p64 = por %p62, %p63
    %p65 = scmp.ne.s32.totalorder %s57, %s59
    %p66 = scmp.eq.s32.totalorder %s14, 1
    %p67 = por %p65, %p66
    %p68 = scmp.ne.s32.totalorder %s59, %s60
    %p69 = scmp.eq.s32.totalorder %s14, 0
    %p70 = por %p68, %p69
    %p71 = scmp.ne.s32.totalorder %s59, %s60
    %p72 = scmp.eq.s32.totalorder %s15, 1
    %p73 = por %p71, %p72
    %p75 = scmp.ne.s32.totalorder %s60, %s74
    %p76 = scmp.eq.s32.totalorder %s15, 0
    %p77 = por %p75, %p76
    %s79 = sadd.s32 %s78, 1
    %p82 = scmp.eq.s32.totalorder %s9, 1
    %p83 = scmp.ne.s32.totalorder %s78, %s80
    %p84 = scmp.eq.s32.totalorder %s9, 0
    %p85 = por %p83, %p84
    %p86 = scmp.ne.s32.totalorder %s78, %s80
    %p87 = scmp.eq.s32.totalorder %s14, 1
    %p88 = por %p86, %p87
    %p89 = scmp.ne.s32.totalorder %s80, %s81
    %p90 = scmp.eq.s32.totalorder %s14, 0
    %p91 = por %p89, %p90
    %p92 = scmp.ne.s32.totalorder %s80, %s81
    %p93 = scmp.eq.s32.totalorder %s15, 1
    %p94 = por %p92, %p93
    %p96 = scmp.ne.s32.totalorder %s81, %s95
    %p97 = scmp.eq.s32.totalorder %s15, 0
    %p98 = por %p96, %p97
    %s99 = ssub.s32 %s16, %s28
    %s100 = ssub.s32 %s17, %s24
    %s101 = sor.u32 %s99, %s100
    %p102 = scmp.eq.s32.totalorder %s101, 0
    %s104 = sadd.s32 %s103, 1
    %s105 = scalar_select %p102, %s103, %s104
    %p108 = pneg %p102
    %p109 = scmp.eq.s32.totalorder %s9, 1
    %p110 = por %p108, %p109
    %p111 = scmp.ne.s32.totalorder %s103, %s106
    %p112 = scmp.eq.s32.totalorder %s9, 0
    %p113 = por %p111, %p112
    %p114 = scmp.ne.s32.totalorder %s103, %s106
    %p115 = scmp.eq.s32.totalorder %s14, 1
    %p116 = por %p114, %p115
    %p117 = scmp.ne.s32.totalorder %s106, %s107
    %p118 = scmp.eq.s32.totalorder %s14, 0
    %p119 = por %p117, %p118
    %p120 = scmp.ne.s32.totalorder %s106, %s107
    %p121 = scmp.eq.s32.totalorder %s15, 1
    %p122 = por %p120, %p121
    %p124 = scmp.ne.s32.totalorder %s107, %s123
    %p125 = scmp.eq.s32.totalorder %s15, 0
    %p126 = por %p124, %p125
    %p127 = scmp.le.s32.totalorder 1, %s9
    %p128 = scmp.lt.s32.totalorder %s9, 3
    %p129 = pnand %p127, %p128
    %p130 = pneg %p129
    // Predicated region
    $region9: #{_side_classifier_stacked.1} parent=5 // pred_check
      _
    $region10: #{_side_classifier_stacked.1} parent=5 // pred_check_branch
      %132 = sbr.rel (%p129) target = $region12
    $region11: #{_side_classifier_stacked.1} parent=5 // pred_region
      %s133 = ssub.s32 %s9, 1
      // Predicated region
      $region13: #{_side_classifier_stacked.1} parent=11 // pred_check
        %p134 = pneg %p70
      $region14: #{_side_classifier_stacked.1} parent=11 // pred_check_branch
        %136 = sbr.rel (%p134) target = $region16
      $region15: #{_side_classifier_stacked.1} parent=11 // pred_region
        _
      $region16: #{_side_classifier_stacked.1} parent=11 // pred_fallthru
        _
      // Predicated region
      $region17: #{_side_classifier_stacked.1} parent=11 // pred_check
        %p137 = pneg %p91
      $region18: #{_side_classifier_stacked.1} parent=11 // pred_check_branch
        %139 = sbr.rel (%p137) target = $region20
      $region19: #{_side_classifier_stacked.1} parent=11 // pred_region
        _
      $region20: #{_side_classifier_stacked.1} parent=11 // pred_fallthru
        _
    $region12: #{_side_classifier_stacked.1} parent=5 // pred_fallthru
      _
    %p140 = scmp.lt.s32.totalorder %s9, 2
    // Predicated region
    $region21: #{_side_classifier_stacked.1} parent=5 // pred_check
      %p141 = pneg %p140
    $region22: #{_side_classifier_stacked.1} parent=5 // pred_check_branch
      %143 = sbr.rel (%p141) target = $region24
    $region23: #{_side_classifier_stacked.1} parent=5 // pred_region
      // Predicated region
      $region25: #{_side_classifier_stacked.1} parent=23 // pred_check
        %p144 = pneg %p43
      $region26: #{_side_classifier_stacked.1} parent=23 // pred_check_branch
        %146 = sbr.rel (%p144) target = $region28
      $region27: #{_side_classifier_stacked.1} parent=23 // pred_region
        %s147 = smul.u32 2, %s17
        %p148 = scmp.lt.s32.totalorder %s16, 1
        %s149 = scalar_select %p148, %s16, 1
        %p150 = scmp.lt.s32.totalorder %s147, 1
        %s151 = scalar_select %p150, %s147, 1
        %s152 = smul.addr %s149, 2
        %s153 = sadd.s32 %s151, %s152
        %s154 = smul.addr %s153, 4
        %s155 = scalar_lea.vmem %s0, %s154
        %s156 = smul.u32 2, %s17
      $region28: #{_side_classifier_stacked.1} parent=23 // pred_fallthru
        _
    $region24: #{_side_classifier_stacked.1} parent=5 // pred_fallthru
      _
    %p157 = scmp.le.s32.totalorder 1, %s9
    %p158 = scmp.lt.s32.totalorder %s9, 3
    %p159 = pnand %p157, %p158
    %p160 = pneg %p159
    // Predicated region
    $region29: #{_side_classifier_stacked.1} parent=5 // pred_check
      _
    $region30: #{_side_classifier_stacked.1} parent=5 // pred_check_branch
      %162 = sbr.rel (%p159) target = $region32
    $region31: #{_side_classifier_stacked.1} parent=5 // pred_region
      %s163 = ssub.s32 %s9, 1
      %s164 = smul.u32 2, %s19
      %p165 = scmp.lt.s32.totalorder %s18, 1
      %s166 = scalar_select %p165, %s18, 1
      %p167 = scmp.lt.s32.totalorder %s164, 1
      %s168 = scalar_select %p167, %s164, 1
      %s169 = smul.addr %s166, 2
      %s170 = sadd.s32 %s168, %s169
      %s171 = smul.addr %s170, 4
      %s172 = scalar_lea.vmem %s0, %s171
      %p173 = pneg %p49
      %p174 = pneg %p46
      %p175 = pneg %p70
      %p176 = pneg %p67
      %p177 = pneg %p91
      %p178 = pneg %p88
      %p179 = pneg %p119
      %p180 = pneg %p116
      %s181 = smul.u32 2, %s19
      %p182 = scmp.lt.s32.totalorder %s18, 1
      %s183 = scalar_select %p182, %s18, 1
      %p184 = scmp.lt.s32.totalorder %s181, 1
      %s185 = scalar_select %p184, %s181, 1
      %s186 = smul.addr %s183, 2
      %s187 = sadd.s32 %s185, %s186
      %s188 = smul.addr %s187, 2
      %s189 = scalar_lea.vmem %s3, %s188
      %s190 = smul.u32 2, %s19
      %p191 = scmp.lt.s32.totalorder %s18, 1
      %s192 = scalar_select %p191, %s18, 1
      %p193 = scmp.lt.s32.totalorder %s190, 1
      %s194 = scalar_select %p193, %s190, 1
      %s195 = smul.addr %s192, 2
      %s196 = sadd.s32 %s194, %s195
      %s197 = smul.addr %s196, 4
      %s198 = scalar_lea.vmem %s0, %s197
      %s199 = smul.u32 2, %s19
      %s200 = smul.u32 2, %s19
      %p201 = scmp.lt.s32.totalorder %s18, 1
      %s202 = scalar_select %p201, %s18, 1
      %p203 = scmp.lt.s32.totalorder %s200, 1
      %s204 = scalar_select %p203, %s200, 1
      %s205 = smul.addr %s202, 2
      %s206 = sadd.s32 %s204, %s205
      %s207 = smul.addr %s206, 2
      %s208 = scalar_lea.vmem %s3, %s207
      %s209 = smul.u32 2, %s19
      %v210 = vld [vmem:[%s1] sm:$0x3]
      %v211 = vld [vmem:[%s2] sm:$0x3]
      %v212 = vld [vmem:[%s198] sm:$0xff]
      %214 = vset.pattern.permute.xlu0 0
      %215 = vperm.xlu0 %214, %v211
      %v216 = vpop.permute.xlu0 %215
      %v219 = vcombine.high %v212, %v212
      %vm220 = vcmask 31744
      %v222 = vsel %vm220, %v210, 0
      %vm224 = vcmask 1043456
      %v225 = vsel %vm224, %v212, 0
      %v227 = vsel %vm224, %v219, 0
      %229 = vmatprep.subr.mxu0 %v227
      %230 = vmatpush1.msra.mxu0 %v225
      %231 = vmatprep.subr.mxu0 0.0
      %232 = vmatpush1.msra.mxu0 0.0
      %233 = vmatprep.subr.mxu0 0.0
      %234 = vmatpush1.msra.mxu0 0.0
      %235 = vmatprep.subr.mxu0 0.0
      %236 = vmatpush1.msra.mxu0 0.0
      %237 = vmatprep.subr.mxu0 0.0
      %238 = vmatpush1.msra.mxu0 0.0
      %239 = vmatprep.subr.mxu0 0.0
      %240 = vmatpush1.msra.mxu0 0.0
      %241 = vmatprep.subr.mxu0 0.0
      %242 = vmatpush1.msra.mxu0 0.0
      %243 = vmatprep.subr.mxu0 0.0
      %244 = vmatpush1.msra.mxu0 0.0
      %245 = vmatprep.subr.mxu0 0.0
      %246 = vmatpush1.msra.mxu0 0.0
      %247 = vmatprep.subr.mxu0 0.0
      %248 = vmatpush1.msra.mxu0 0.0
      %249 = vmatprep.subr.mxu0 0.0
      %250 = vmatpush1.msra.mxu0 0.0
      %251 = vmatprep.subr.mxu0 0.0
      %252 = vmatpush1.msra.mxu0 0.0
      %253 = vmatprep.subr.mxu0 0.0
      %254 = vmatpush1.msra.mxu0 0.0
      %255 = vmatprep.subr.mxu0 0.0
      %256 = vmatpush1.msra.mxu0 0.0
      %257 = vmatprep.subr.mxu0 0.0
      %258 = vmatpush1.msra.mxu0 0.0
      %259 = vmatprep.subr.mxu0 0.0
      %260 = vmatpush1.msra.mxu0 0.0
      %261 = vmatprep.subr.mxu0 0.0
      %262 = vmatpush1.msra.mxu0 0.0
      %263 = vmatprep.subr.mxu0 0.0
      %264 = vmatpush1.msra.mxu0 0.0
      %265 = vmatprep.subr.mxu0 0.0
      %266 = vmatpush1.msra.mxu0 0.0
      %267 = vmatprep.subr.mxu0 0.0
      %268 = vmatpush1.msra.mxu0 0.0
      %269 = vmatprep.subr.mxu0 0.0
      %270 = vmatpush1.msra.mxu0 0.0
      %271 = vmatprep.subr.mxu0 0.0
      %272 = vmatpush1.msra.mxu0 0.0
      %273 = vmatprep.subr.mxu0 0.0
      %274 = vmatpush1.msra.mxu0 0.0
      %275 = vmatprep.subr.mxu0 0.0
      %276 = vmatpush1.msra.mxu0 0.0
      %277 = vmatprep.subr.mxu0 0.0
      %278 = vmatpush1.msra.mxu0 0.0
      %279 = vmatprep.subr.mxu0 0.0
      %280 = vmatpush1.msra.mxu0 0.0
      %281 = vmatprep.subr.mxu0 0.0
      %282 = vmatpush1.msra.mxu0 0.0
      %283 = vmatprep.subr.mxu0 0.0
      %284 = vmatpush1.msra.mxu0 0.0
      %285 = vmatprep.subr.mxu0 0.0
      %286 = vmatpush1.msra.mxu0 0.0
      %287 = vmatprep.subr.mxu0 0.0
      %288 = vmatpush1.msra.mxu0 0.0
      %289 = vmatprep.subr.mxu0 0.0
      %290 = vmatpush1.msra.mxu0 0.0
      %291 = vmatprep.subr.mxu0 0.0
      %292 = vmatpush1.msra.mxu0 0.0
      %293 = vmatprep.mubr.f32.mxu0 0.0
      %294 = vmatmul.mubr.f32.gmra.mrb[0].mxu0 %v222
      %v295 = vpop.f32.mrb[0].mxu0
      %v296 = vadd.f32 %v216, %v295
      %v297 = vpop.f32.mrb[0].mxu0
      %v298 = vadd.f32 %v216, %v297
      %299 = vdwg.mxu0
      %v302 = vcombine.low %v296, %v298
      %v304 = vunpack.c.l.s4 1983009808
      %v305 = vunpack.c.0.s8 %v304
      %v306 = vlaneseq
      %v307 = vshrl.u32 %v306, 7
      %v308 = vsub.s32 %v305, %v307
      %v309 = vrot.slane %v302, %v308
      %311 = vst [vmem:[%s208] sm:$0xf] %v309
      %s312 = smul.u32 2, %s19
      %p313 = scmp.lt.s32.totalorder %s18, 1
      %s314 = scalar_select %p313, %s18, 1
      %p315 = scmp.lt.s32.totalorder %s312, 1
      %s316 = scalar_select %p315, %s312, 1
      %s317 = smul.addr %s314, 2
      %s318 = sadd.s32 %s316, %s317
      %s319 = smul.addr %s318, 2
      %s320 = scalar_lea.vmem %s3, %s319
      // Predicated region
      $region33: #{_side_classifier_stacked.1} parent=31 // pred_check
        %p321 = pneg %p116
      $region34: #{_side_classifier_stacked.1} parent=31 // pred_check_branch
        %323 = sbr.rel (%p321) target = $region36
      $region35: #{_side_classifier_stacked.1} parent=31 // pred_region
        %s324 = smul.u32 2, %s19
      $region36: #{_side_classifier_stacked.1} parent=31 // pred_fallthru
        _
    $region32: #{_side_classifier_stacked.1} parent=5 // pred_fallthru
      _
    %p325 = scmp.le.s32.totalorder 2, %s9
    // Predicated region
    $region37: #{_side_classifier_stacked.1} parent=5 // pred_check
      %p326 = pneg %p325
    $region38: #{_side_classifier_stacked.1} parent=5 // pred_check_branch
      %328 = sbr.rel (%p326) target = $region40
    $region39: #{_side_classifier_stacked.1} parent=5 // pred_region
      %s329 = ssub.s32 %s9, 2
      // Predicated region
      $region41: #{_side_classifier_stacked.1} parent=39 // pred_check
        %p330 = pneg %p122
      $region42: #{_side_classifier_stacked.1} parent=39 // pred_check_branch
        %332 = sbr.rel (%p330) target = $region44
      $region43: #{_side_classifier_stacked.1} parent=39 // pred_region
        %s333 = smul.u32 2, %s21
        %p334 = scmp.lt.s32.totalorder %s20, 1
        %s335 = scalar_select %p334, %s20, 1
        %p336 = scmp.lt.s32.totalorder %s333, 1
        %s337 = scalar_select %p336, %s333, 1
        %s338 = smul.addr %s335, 2
        %s339 = sadd.s32 %s337, %s338
        %s340 = smul.addr %s339, 2
        %s341 = scalar_lea.vmem %s3, %s340
      $region44: #{_side_classifier_stacked.1} parent=39 // pred_fallthru
        _
    $region40: #{_side_classifier_stacked.1} parent=5 // pred_fallthru
      _
  $region6: #{_side_classifier_stacked.1} parent=0 // loop_footer
    %s13 = sadd.s32 1, %s9
  $region7: #{_side_classifier_stacked.1} parent=0 // loop_footer_branch
    %8 = sbr.rel target = $region3
  $region8: #{_side_classifier_stacked.1} parent=0 // loop_exit
    _

</llo_original>
